<compile_context>
chip_gen: v5e
topology: v5e:2x2
jax: 0.10.0
libtpu: 0.0.40
codegen_flags: <defaults>
</compile_context>

<pallas_src>
import functools

import jax
import jax.numpy as jnp
import numpy as np
from jax.experimental import pallas as pl
from jax.experimental.pallas import tpu as pltpu

EPS = 1e-5
_LANES = 128
_ROWS_PER_BLOCK = 16          # 2048 lanes per grid step (multiple of 8 sublanes)
_LAB_CH = 6                   # {l0, l1, tgt, split, is_sp, valid}
_PTS_CH = 5                   # {dy, dx, split, is_sp, valid}
_NACC = 12                    # 3 CE nums, 3 CE dens, 3 pts nums, 3 pts dens


# -----------------------------------------------------------------------------
# Fused Pallas kernel: both losses, grid over element blocks, VMEM accumulator.
# -----------------------------------------------------------------------------
def _criterion_kernel(lab_ref, pts_ref, out_ref, acc_ref, *, eos_coef, div_thr):
    step = pl.program_id(0)

    @pl.when(step == 0)
    def _init():
        acc_ref[...] = jnp.zeros_like(acc_ref)

    # ---------------- labels: weighted 2-class cross entropy -----------------
    l0, l1 = lab_ref[0], lab_ref[1]
    tgt, spl = lab_ref[2], lab_ref[3]
    issp, valid = lab_ref[4], lab_ref[5]

    picked = jnp.where(tgt > 0.5, l1, l0)
    # 2-class logsumexp closed form: 1 exp + 1 log per element (EUP path).
    ce = jnp.maximum(l0, l1) + jnp.log(1.0 + jnp.exp(-jnp.abs(l0 - l1))) - picked
    w = jnp.where(tgt > 0.5, 1.0, eos_coef) * valid            # empty_weight, pad -> 0
    wd = w * (spl > div_thr).astype(jnp.float32)                # divided queries
    wn = w - wd                                                 # non-divided queries
    d_sp = wd * issp
    d_ds = wd - d_sp
    acc_ref[0] += ce * d_sp
    acc_ref[1] += ce * d_ds
    acc_ref[2] += ce * wn
    acc_ref[3] += d_sp
    acc_ref[4] += d_ds
    acc_ref[5] += wn

    # ---------------- points: smooth-L1 on matched pairs ---------------------
    dy, dx = pts_ref[0], pts_ref[1]
    pdiv, pissp, pvalid = pts_ref[2], pts_ref[3], pts_ref[4]

    ady, adx = jnp.abs(dy), jnp.abs(dx)
    sl1 = (jnp.where(ady < 1.0, 0.5 * dy * dy, ady - 0.5)
           + jnp.where(adx < 1.0, 0.5 * dx * dx, adx - 0.5))
    pdm = (pdiv > div_thr).astype(jnp.float32) * pvalid
    pnd = pvalid - pdm
    psp = pissp * pvalid
    pds = pvalid - psp
    acc_ref[6] += sl1 * pdm * psp
    acc_ref[7] += sl1 * pdm * pds
    acc_ref[8] += sl1 * pnd
    acc_ref[9] += psp
    acc_ref[10] += pds
    acc_ref[11] += pnd

    # ---------------- finalize: 12 reductions -> 2 scalars (exact division) --
    @pl.when(step == pl.num_programs(0) - 1)
    def _finalize():
        s = [jnp.sum(acc_ref[c]) for c in range(_NACC)]
        loss_ce = (s[0] / (s[3] + EPS)
                   + s[1] / (s[4] + EPS)
                   + s[2] / (s[5] + EPS))
        loss_pts = (s[6] / (s[9] + EPS)
                    + s[7] / (s[10] + EPS)
                    + s[8] / (s[11] + EPS))
        out_ref[0, 0] = loss_ce
        out_ref[0, 1] = loss_pts


# -----------------------------------------------------------------------------
# Jitted core: slab packing (minimal glue, no transposes) + one pallas_call.
# -----------------------------------------------------------------------------
@functools.partial(
    jax.jit, static_argnames=("eos_coef", "div_thr", "img_h", "img_w"))
def _criterion_impl(pred_logits, pred_points, split_map, densities,
                    labels_cat, points_cat, batch_idx, src_idx,
                    *, eos_coef, div_thr, img_h, img_w):
    B, Q, _ = pred_logits.shape
    L = B * Q
    N = batch_idx.shape[0]

    block_lanes = _ROWS_PER_BLOCK * _LANES
    nblocks = max(1, -(-max(L, N) // block_lanes))      # ceil div; shared grid length
    R = nblocks * _ROWS_PER_BLOCK
    P = R * _LANES                                      # padded lane count per slab

    # ---- per-image density split: denser half = "sp" bucket (torch.sort asc) ----
    sp_img = jnp.argsort(densities)[B // 2:]
    is_sp = jnp.zeros((B,), jnp.float32).at[sp_img].set(1.0)

    # ---- labels slab (6, R, 128): one full (sublane, lane) tile per channel ----
    target_classes = jnp.zeros((B, Q), jnp.float32).at[batch_idx, src_idx].set(
        labels_cat.astype(jnp.float32))
    lab = jnp.stack([
        pred_logits[..., 0].reshape(L).astype(jnp.float32),
        pred_logits[..., 1].reshape(L).astype(jnp.float32),
        target_classes.reshape(L),
        split_map.reshape(L).astype(jnp.float32),
        jnp.broadcast_to(is_sp[:, None], (B, Q)).reshape(L),
        jnp.ones((L,), jnp.float32),
    ], axis=0)
    lab_slab = jnp.pad(lab, ((0, 0), (0, P - L))).reshape(_LAB_CH, R, _LANES)

    # ---- points slab (5, R, 128): {dy, dx, split, is_sp, valid} on matched pairs ----
    src_pts = pred_points[batch_idx, src_idx].astype(jnp.float32)         # (N, 2)
    tgt_pts = points_cat.astype(jnp.float32) / jnp.array([img_h, img_w], jnp.float32)
    diff = src_pts - tgt_pts
    pts = jnp.stack([
        diff[:, 0],
        diff[:, 1],
        split_map[batch_idx, src_idx].astype(jnp.float32),
        is_sp[batch_idx],
        jnp.ones((N,), jnp.float32),
    ], axis=0)
    pts_slab = jnp.pad(pts, ((0, 0), (0, P - N))).reshape(_PTS_CH, R, _LANES)

    kernel = functools.partial(_criterion_kernel, eos_coef=eos_coef, div_thr=div_thr)
    out = pl.pallas_call(
        kernel,
        out_shape=jax.ShapeDtypeStruct((1, 2), jnp.float32),
        grid_spec=pltpu.PrefetchScalarGridSpec(
            num_scalar_prefetch=0,
            grid=(nblocks,),
            in_specs=[
                pl.BlockSpec((_LAB_CH, _ROWS_PER_BLOCK, _LANES), lambda i: (0, i, 0)),
                pl.BlockSpec((_PTS_CH, _ROWS_PER_BLOCK, _LANES), lambda i: (0, i, 0)),
            ],
            out_specs=pl.BlockSpec((1, 2), lambda i: (0, 0),
                                   memory_space=pltpu.MemorySpace.SMEM),
            scratch_shapes=[pltpu.VMEM((_NACC, _ROWS_PER_BLOCK, _LANES), jnp.float32)],
        ),
        compiler_params=pltpu.CompilerParams(
            dimension_semantics=("arbitrary",),
            vmem_limit_bytes=32 * 1024 * 1024),
        cost_estimate=pl.CostEstimate(
            flops=48 * P,
            transcendentals=2 * P,
            bytes_accessed=4 * (_LAB_CH + _PTS_CH) * P + 8),
    )(lab_slab, pts_slab)

    return {'loss_ce': out[0, 0], 'loss_points': out[0, 1]}


# -----------------------------------------------------------------------------
# SetCriterion.forward equivalent (losses = ['labels','points'], 'div' kwarg path,
# loss_f = 'smooth_l1').  Host-side glue: matcher stand-in + concatenation.
# -----------------------------------------------------------------------------
def _identity_match(targets):
    # TODO(synk): Hungarian matcher (scipy linear_sum_assignment) is an external module;
    # replaced with a deterministic identity assignment for this harness.
    return [(np.arange(int(t['points'].shape[0]), dtype=np.int32),
             np.arange(int(t['points'].shape[0]), dtype=np.int32)) for t in targets]


def set_criterion_forward(outputs, targets, split_map, *, eos_coef, div_thrs_dict,
                          loss_f='smooth_l1', epoch=0):
    del loss_f, epoch  # only the smooth_l1 'div' branch is implemented
    pred_logits = outputs['pred_logits']          # (B, Q, 2)
    pred_points = outputs['pred_points']          # (B, Q, 2)
    img_h, img_w = outputs['img_shape']
    div_thr = float(div_thrs_dict[outputs['pq_stride']])
    B, Q, C = pred_logits.shape
    assert C == 2, "crowd counting: num_classes = 1"

    indices = _identity_match(targets)

    # num_points (world_size == 1, clamp min 1) -- unused in the 'div' path but mirrored.
    _ = max(float(sum(int(t['labels'].shape[0]) for t in targets)), 1.0)

    batch_idx = np.concatenate([np.full(src.shape, i, np.int32)
                                for i, (src, _) in enumerate(indices)])
    src_idx = np.concatenate([src for src, _ in indices])

    labels_cat = jnp.concatenate(
        [t['labels'][J] for t, (_, J) in zip(targets, indices)]).astype(jnp.int32)
    points_cat = jnp.concatenate(
        [t['points'][i] for t, (_, i) in zip(targets, indices)], axis=0).astype(jnp.float32)
    densities = jnp.asarray([t['density'] for t in targets], jnp.float32)

    return _criterion_impl(pred_logits, pred_points, split_map, densities,
                           labels_cat, points_cat,
                           jnp.asarray(batch_idx), jnp.asarray(src_idx),
                           eos_coef=float(eos_coef), div_thr=div_thr,
                           img_h=float(img_h), img_w=float(img_w))


# -----------------------------------------------------------------------------
# Pure-numpy reference: direct transcription of SetCriterion.loss_labels /
# loss_points ('div' path, smooth_l1) from the PyTorch module.
# -----------------------------------------------------------------------------
def _reference_losses(pred_logits, pred_points, split_map, targets, indices,
                      eos_coef, div_thr, img_h, img_w):
    logits = np.asarray(pred_logits, np.float64)
    points = np.asarray(pred_points, np.float64)
    smap = np.asarray(split_map, np.float64)
    B, Q, _ = logits.shape
    eps = 1e-5

    batch_idx = np.concatenate([np.full(len(s), i, np.int64)
                                for i, (s, _) in enumerate(indices)])
    src_idx = np.concatenate([np.asarray(s, np.int64) for s, _ in indices])
    labels_o = np.concatenate([np.asarray(t['labels'])[np.asarray(j)]
                               for t, (_, j) in zip(targets, indices)])

    tgt_cls = np.zeros((B, Q), np.int64)
    tgt_cls[batch_idx, src_idx] = labels_o
    weights = np.where(tgt_cls == 1, 1.0, eos_coef)
    lse = np.logaddexp(logits[..., 0], logits[..., 1])
    picked = np.take_along_axis(logits, tgt_cls[..., None], axis=-1)[..., 0]
    raw_ce = lse - picked

    dens = np.asarray([t['density'] for t in targets], np.float64)
    order = np.argsort(dens)
    ds_img, sp_img = order[:B // 2], order[B // 2:]
    div_mask = smap > div_thr
    non_div = ~div_mask

    num = raw_ce * weights * div_mask
    den = weights * div_mask
    loss_ce = (num[sp_img].sum() / (den[sp_img].sum() + eps)
               + num[ds_img].sum() / (den[ds_img].sum() + eps)
               + (raw_ce * weights * non_div).sum() / ((weights * non_div).sum() + eps))

    src_pts = points[batch_idx, src_idx]
    tgt_pts = np.concatenate([np.asarray(t['points'], np.float64)[np.asarray(j)]
                              for t, (_, j) in zip(targets, indices)], axis=0)
    tgt_pts = tgt_pts / np.array([img_h, img_w], np.float64)
    d = src_pts - tgt_pts
    ad = np.abs(d)
    sl1 = np.where(ad < 1.0, 0.5 * d * d, ad - 0.5)
    div_q = div_mask[batch_idx, src_idx]
    nondiv_q = non_div[batch_idx, src_idx]
    in_sp = np.isin(batch_idx, sp_img)
    in_ds = np.isin(batch_idx, ds_img)
    lp_div = sl1 * div_q[:, None]
    loss_pts = (lp_div[in_sp].sum() / (in_sp.sum() + eps)
                + lp_div[in_ds].sum() / (in_ds.sum() + eps)
                + (sl1 * nondiv_q[:, None]).sum() / (nondiv_q.sum() + eps))
    return loss_ce, loss_pts


# -----------------------------------------------------------------------------
if __name__ == "__main__":
    key = jax.random.PRNGKey(0)
    k1, k2, k3, k4 = jax.random.split(key, 4)

    B, Q, C = 2, 256, 2          # batch, point queries, (no-object, person)
    img_h, img_w = 64, 64
    n_pts = [5, 7]               # ground-truth points per image

    pred_logits = jax.random.normal(k1, (B, Q, C), jnp.float32)
    pred_points = jax.random.uniform(k2, (B, Q, 2), jnp.float32)          # normalized preds
    split_map = jax.random.uniform(k3, (B, Q), jnp.float32)               # quadtree split map

    targets = []
    for b in range(B):
        kb = jax.random.fold_in(k4, b)
        pts = jax.random.uniform(kb, (n_pts[b], 2), jnp.float32) * \
            jnp.array([img_h - 1, img_w - 1], jnp.float32)                # pixel coords
        targets.append({
            'points': pts,
            'labels': jnp.ones((n_pts[b],), jnp.int32),
            'density': float(n_pts[b]) / float(img_h * img_w),
        })

    outputs = {
        'pred_logits': pred_logits,
        'pred_points': pred_points,
        'img_shape': (img_h, img_w),
        'pq_stride': 4,           # dense stride -> div threshold 0.5
    }
    criterion_cfg = dict(eos_coef=0.5, div_thrs_dict={8: 0.0, 4: 0.5})

    losses = set_criterion_forward(outputs, targets, split_map, **criterion_cfg)
    jax.block_until_ready(losses)

    ref_ce, ref_pts = _reference_losses(
        pred_logits, pred_points, split_map, targets, _identity_match(targets),
        eos_coef=0.5, div_thr=0.5, img_h=img_h, img_w=img_w)

    assert np.allclose(np.asarray(losses['loss_ce']), ref_ce, rtol=5e-4, atol=1e-5), \
        f"loss_ce: pallas={losses['loss_ce']} ref={ref_ce}"
    assert np.allclose(np.asarray(losses['loss_points']), ref_pts, rtol=5e-4, atol=1e-5), \
        f"loss_points: pallas={losses['loss_points']} ref={ref_pts}"

    print("KERNEL_OK")
</pallas_src>

<mosaic_0001>
module attributes {stable_mosaic.version = 11 : i64} {
  func.func @_criterion_kernel(%arg0: i32, %arg1: memref<6x16x128xf32, #tpu.memory_space<vmem>>, %arg2: memref<5x16x128xf32, #tpu.memory_space<vmem>>, %arg3: memref<1x2xf32, #tpu.memory_space<smem>>, %arg4: memref<12x16x128xf32, #tpu.memory_space<vmem>>) attributes {dimension_semantics = [#tpu.dimension_semantics<arbitrary>], iteration_bounds = array<i64: 1>, scalar_prefetch = 0 : i64, scratch_operands = 1 : i64, tpu.core_type = #tpu.core_type<tc>, window_params = [{transform_indices = @transform_0, window_bounds = array<i64: 6, 16, 128>}, {transform_indices = @transform_1, window_bounds = array<i64: 5, 16, 128>}, {transform_indices = @transform_2, window_bounds = array<i64: 1, 2>}]} {
    %c0_i32 = arith.constant 0 : i32
    %0 = arith.cmpi eq, %arg0, %c0_i32 : i32
    %1 = arith.extui %0 : i1 to i32
    %c0_i32_0 = arith.constant 0 : i32
    %2 = arith.cmpi ne, %1, %c0_i32_0 : i32
    scf.if %2 {
      %cst_109 = arith.constant 0.000000e+00 : f32
      %163 = vector.broadcast %cst_109 : f32 to vector<12x16x128xf32>
      %c0_110 = arith.constant 0 : index
      %c0_111 = arith.constant 0 : index
      %c0_112 = arith.constant 0 : index
      %164 = vector.load %arg4[%c0_110, %c0_111, %c0_112] : memref<12x16x128xf32, #tpu.memory_space<vmem>>, vector<12x16x128xf32>
      tpu.vector_store %arg4[%c0_110, %c0_111, %c0_112], %163 {strides = array<i32>} : memref<12x16x128xf32, #tpu.memory_space<vmem>>, vector<12x16x128xf32>,
    } else {
    }
    %c0 = arith.constant 0 : index
    %c0_1 = arith.constant 0 : index
    %c0_2 = arith.constant 0 : index
    %3 = vector.load %arg1[%c0, %c0_1, %c0_2] : memref<6x16x128xf32, #tpu.memory_space<vmem>>, vector<1x16x128xf32>
    %4 = vector.shape_cast %3 : vector<1x16x128xf32> to vector<16x128xf32>
    %c1 = arith.constant 1 : index
    %c0_3 = arith.constant 0 : index
    %c0_4 = arith.constant 0 : index
    %5 = vector.load %arg1[%c1, %c0_3, %c0_4] : memref<6x16x128xf32, #tpu.memory_space<vmem>>, vector<1x16x128xf32>
    %6 = vector.shape_cast %5 : vector<1x16x128xf32> to vector<16x128xf32>
    %c2 = arith.constant 2 : index
    %c0_5 = arith.constant 0 : index
    %c0_6 = arith.constant 0 : index
    %7 = vector.load %arg1[%c2, %c0_5, %c0_6] : memref<6x16x128xf32, #tpu.memory_space<vmem>>, vector<1x16x128xf32>
    %8 = vector.shape_cast %7 : vector<1x16x128xf32> to vector<16x128xf32>
    %c3 = arith.constant 3 : index
    %c0_7 = arith.constant 0 : index
    %c0_8 = arith.constant 0 : index
    %9 = vector.load %arg1[%c3, %c0_7, %c0_8] : memref<6x16x128xf32, #tpu.memory_space<vmem>>, vector<1x16x128xf32>
    %10 = vector.shape_cast %9 : vector<1x16x128xf32> to vector<16x128xf32>
    %c4 = arith.constant 4 : index
    %c0_9 = arith.constant 0 : index
    %c0_10 = arith.constant 0 : index
    %11 = vector.load %arg1[%c4, %c0_9, %c0_10] : memref<6x16x128xf32, #tpu.memory_space<vmem>>, vector<1x16x128xf32>
    %12 = vector.shape_cast %11 : vector<1x16x128xf32> to vector<16x128xf32>
    %c5 = arith.constant 5 : index
    %c0_11 = arith.constant 0 : index
    %c0_12 = arith.constant 0 : index
    %13 = vector.load %arg1[%c5, %c0_11, %c0_12] : memref<6x16x128xf32, #tpu.memory_space<vmem>>, vector<1x16x128xf32>
    %14 = vector.shape_cast %13 : vector<1x16x128xf32> to vector<16x128xf32>
    %cst = arith.constant 5.000000e-01 : f32
    %15 = vector.broadcast %cst : f32 to vector<16x128xf32>
    %16 = arith.cmpf ogt, %8, %15 : vector<16x128xf32>
    %17 = arith.select %16, %6, %4 : vector<16x128xi1>, vector<16x128xf32>
    %18 = arith.maximumf %4, %6 : vector<16x128xf32>
    %19 = arith.subf %4, %6 : vector<16x128xf32>
    %20 = math.absf %19 : vector<16x128xf32>
    %cst_13 = arith.constant 0.000000e+00 : f32
    %21 = vector.broadcast %cst_13 : f32 to vector<16x128xf32>
    %22 = arith.subf %21, %20 : vector<16x128xf32>
    %23 = math.exp %22 : vector<16x128xf32>
    %cst_14 = arith.constant 1.000000e+00 : f32
    %24 = vector.broadcast %cst_14 : f32 to vector<16x128xf32>
    %25 = arith.addf %24, %23 : vector<16x128xf32>
    %26 = math.log %25 : vector<16x128xf32>
    %27 = arith.addf %18, %26 : vector<16x128xf32>
    %28 = arith.subf %27, %17 : vector<16x128xf32>
    %cst_15 = arith.constant 5.000000e-01 : f32
    %29 = vector.broadcast %cst_15 : f32 to vector<16x128xf32>
    %30 = arith.cmpf ogt, %8, %29 : vector<16x128xf32>
    %cst_16 = arith.constant 1.000000e+00 : f32
    %cst_17 = arith.constant 5.000000e-01 : f32
    %31 = vector.broadcast %cst_16 : f32 to vector<16x128xf32>
    %32 = vector.broadcast %cst_17 : f32 to vector<16x128xf32>
    %33 = arith.select %30, %31, %32 : vector<16x128xi1>, vector<16x128xf32>
    %34 = arith.mulf %33, %14 : vector<16x128xf32>
    %cst_18 = arith.constant 5.000000e-01 : f32
    %35 = vector.broadcast %cst_18 : f32 to vector<16x128xf32>
    %36 = arith.cmpf ogt, %10, %35 : vector<16x128xf32>
    %37 = arith.extui %36 : vector<16x128xi1> to vector<16x128xi32>
    %38 = arith.sitofp %37 : vector<16x128xi32> to vector<16x128xf32>
    %39 = arith.mulf %34, %38 : vector<16x128xf32>
    %40 = arith.subf %34, %39 : vector<16x128xf32>
    %41 = arith.mulf %39, %12 : vector<16x128xf32>
    %42 = arith.subf %39, %41 : vector<16x128xf32>
    %c0_19 = arith.constant 0 : index
    %c0_20 = arith.constant 0 : index
    %c0_21 = arith.constant 0 : index
    %43 = vector.load %arg4[%c0_19, %c0_20, %c0_21] : memref<12x16x128xf32, #tpu.memory_space<vmem>>, vector<1x16x128xf32>
    %44 = vector.shape_cast %43 : vector<1x16x128xf32> to vector<16x128xf32>
    %45 = arith.mulf %28, %41 : vector<16x128xf32>
    %46 = arith.addf %44, %45 : vector<16x128xf32>
    %c0_22 = arith.constant 0 : index
    %c0_23 = arith.constant 0 : index
    %c0_24 = arith.constant 0 : index
    %47 = vector.load %arg4[%c0_22, %c0_23, %c0_24] : memref<12x16x128xf32, #tpu.memory_space<vmem>>, vector<1x16x128xf32>
    %48 = vector.shape_cast %47 : vector<1x16x128xf32> to vector<16x128xf32>
    %49 = vector.shape_cast %46 : vector<16x128xf32> to vector<1x16x128xf32>
    tpu.vector_store %arg4[%c0_22, %c0_23, %c0_24], %49 {strides = array<i32>} : memref<12x16x128xf32, #tpu.memory_space<vmem>>, vector<1x16x128xf32>,
    %c1_25 = arith.constant 1 : index
    %c0_26 = arith.constant 0 : index
    %c0_27 = arith.constant 0 : index
    %50 = vector.load %arg4[%c1_25, %c0_26, %c0_27] : memref<12x16x128xf32, #tpu.memory_space<vmem>>, vector<1x16x128xf32>
    %51 = vector.shape_cast %50 : vector<1x16x128xf32> to vector<16x128xf32>
    %52 = arith.mulf %28, %42 : vector<16x128xf32>
    %53 = arith.addf %51, %52 : vector<16x128xf32>
    %c1_28 = arith.constant 1 : index
    %c0_29 = arith.constant 0 : index
    %c0_30 = arith.constant 0 : index
    %54 = vector.load %arg4[%c1_28, %c0_29, %c0_30] : memref<12x16x128xf32, #tpu.memory_space<vmem>>, vector<1x16x128xf32>
    %55 = vector.shape_cast %54 : vector<1x16x128xf32> to vector<16x128xf32>
    %56 = vector.shape_cast %53 : vector<16x128xf32> to vector<1x16x128xf32>
    tpu.vector_store %arg4[%c1_28, %c0_29, %c0_30], %56 {strides = array<i32>} : memref<12x16x128xf32, #tpu.memory_space<vmem>>, vector<1x16x128xf32>,
    %c2_31 = arith.constant 2 : index
    %c0_32 = arith.constant 0 : index
    %c0_33 = arith.constant 0 : index
    %57 = vector.load %arg4[%c2_31, %c0_32, %c0_33] : memref<12x16x128xf32, #tpu.memory_space<vmem>>, vector<1x16x128xf32>
    %58 = vector.shape_cast %57 : vector<1x16x128xf32> to vector<16x128xf32>
    %59 = arith.mulf %28, %40 : vector<16x128xf32>
    %60 = arith.addf %58, %59 : vector<16x128xf32>
    %c2_34 = arith.constant 2 : index
    %c0_35 = arith.constant 0 : index
    %c0_36 = arith.constant 0 : index
    %61 = vector.load %arg4[%c2_34, %c0_35, %c0_36] : memref<12x16x128xf32, #tpu.memory_space<vmem>>, vector<1x16x128xf32>
    %62 = vector.shape_cast %61 : vector<1x16x128xf32> to vector<16x128xf32>
    %63 = vector.shape_cast %60 : vector<16x128xf32> to vector<1x16x128xf32>
    tpu.vector_store %arg4[%c2_34, %c0_35, %c0_36], %63 {strides = array<i32>} : memref<12x16x128xf32, #tpu.memory_space<vmem>>, vector<1x16x128xf32>,
    %c3_37 = arith.constant 3 : index
    %c0_38 = arith.constant 0 : index
    %c0_39 = arith.constant 0 : index
    %64 = vector.load %arg4[%c3_37, %c0_38, %c0_39] : memref<12x16x128xf32, #tpu.memory_space<vmem>>, vector<1x16x128xf32>
    %65 = vector.shape_cast %64 : vector<1x16x128xf32> to vector<16x128xf32>
    %66 = arith.addf %65, %41 : vector<16x128xf32>
    %c3_40 = arith.constant 3 : index
    %c0_41 = arith.constant 0 : index
    %c0_42 = arith.constant 0 : index
    %67 = vector.load %arg4[%c3_40, %c0_41, %c0_42] : memref<12x16x128xf32, #tpu.memory_space<vmem>>, vector<1x16x128xf32>
    %68 = vector.shape_cast %67 : vector<1x16x128xf32> to vector<16x128xf32>
    %69 = vector.shape_cast %66 : vector<16x128xf32> to vector<1x16x128xf32>
    tpu.vector_store %arg4[%c3_40, %c0_41, %c0_42], %69 {strides = array<i32>} : memref<12x16x128xf32, #tpu.memory_space<vmem>>, vector<1x16x128xf32>,
    %c4_43 = arith.constant 4 : index
    %c0_44 = arith.constant 0 : index
    %c0_45 = arith.constant 0 : index
    %70 = vector.load %arg4[%c4_43, %c0_44, %c0_45] : memref<12x16x128xf32, #tpu.memory_space<vmem>>, vector<1x16x128xf32>
    %71 = vector.shape_cast %70 : vector<1x16x128xf32> to vector<16x128xf32>
    %72 = arith.addf %71, %42 : vector<16x128xf32>
    %c4_46 = arith.constant 4 : index
    %c0_47 = arith.constant 0 : index
    %c0_48 = arith.constant 0 : index
    %73 = vector.load %arg4[%c4_46, %c0_47, %c0_48] : memref<12x16x128xf32, #tpu.memory_space<vmem>>, vector<1x16x128xf32>
    %74 = vector.shape_cast %73 : vector<1x16x128xf32> to vector<16x128xf32>
    %75 = vector.shape_cast %72 : vector<16x128xf32> to vector<1x16x128xf32>
    tpu.vector_store %arg4[%c4_46, %c0_47, %c0_48], %75 {strides = array<i32>} : memref<12x16x128xf32, #tpu.memory_space<vmem>>, vector<1x16x128xf32>,
    %c5_49 = arith.constant 5 : index
    %c0_50 = arith.constant 0 : index
    %c0_51 = arith.constant 0 : index
    %76 = vector.load %arg4[%c5_49, %c0_50, %c0_51] : memref<12x16x128xf32, #tpu.memory_space<vmem>>, vector<1x16x128xf32>
    %77 = vector.shape_cast %76 : vector<1x16x128xf32> to vector<16x128xf32>
    %78 = arith.addf %77, %40 : vector<16x128xf32>
    %c5_52 = arith.constant 5 : index
    %c0_53 = arith.constant 0 : index
    %c0_54 = arith.constant 0 : index
    %79 = vector.load %arg4[%c5_52, %c0_53, %c0_54] : memref<12x16x128xf32, #tpu.memory_space<vmem>>, vector<1x16x128xf32>
    %80 = vector.shape_cast %79 : vector<1x16x128xf32> to vector<16x128xf32>
    %81 = vector.shape_cast %78 : vector<16x128xf32> to vector<1x16x128xf32>
    tpu.vector_store %arg4[%c5_52, %c0_53, %c0_54], %81 {strides = array<i32>} : memref<12x16x128xf32, #tpu.memory_space<vmem>>, vector<1x16x128xf32>,
    %c0_55 = arith.constant 0 : index
    %c0_56 = arith.constant 0 : index
    %c0_57 = arith.constant 0 : index
    %82 = vector.load %arg2[%c0_55, %c0_56, %c0_57] : memref<5x16x128xf32, #tpu.memory_space<vmem>>, vector<1x16x128xf32>
    %83 = vector.shape_cast %82 : vector<1x16x128xf32> to vector<16x128xf32>
    %c1_58 = arith.constant 1 : index
    %c0_59 = arith.constant 0 : index
    %c0_60 = arith.constant 0 : index
    %84 = vector.load %arg2[%c1_58, %c0_59, %c0_60] : memref<5x16x128xf32, #tpu.memory_space<vmem>>, vector<1x16x128xf32>
    %85 = vector.shape_cast %84 : vector<1x16x128xf32> to vector<16x128xf32>
    %c2_61 = arith.constant 2 : index
    %c0_62 = arith.constant 0 : index
    %c0_63 = arith.constant 0 : index
    %86 = vector.load %arg2[%c2_61, %c0_62, %c0_63] : memref<5x16x128xf32, #tpu.memory_space<vmem>>, vector<1x16x128xf32>
    %87 = vector.shape_cast %86 : vector<1x16x128xf32> to vector<16x128xf32>
    %c3_64 = arith.constant 3 : index
    %c0_65 = arith.constant 0 : index
    %c0_66 = arith.constant 0 : index
    %88 = vector.load %arg2[%c3_64, %c0_65, %c0_66] : memref<5x16x128xf32, #tpu.memory_space<vmem>>, vector<1x16x128xf32>
    %89 = vector.shape_cast %88 : vector<1x16x128xf32> to vector<16x128xf32>
    %c4_67 = arith.constant 4 : index
    %c0_68 = arith.constant 0 : index
    %c0_69 = arith.constant 0 : index
    %90 = vector.load %arg2[%c4_67, %c0_68, %c0_69] : memref<5x16x128xf32, #tpu.memory_space<vmem>>, vector<1x16x128xf32>
    %91 = vector.shape_cast %90 : vector<1x16x128xf32> to vector<16x128xf32>
    %92 = math.absf %83 : vector<16x128xf32>
    %93 = math.absf %85 : vector<16x128xf32>
    %cst_70 = arith.constant 1.000000e+00 : f32
    %94 = vector.broadcast %cst_70 : f32 to vector<16x128xf32>
    %95 = arith.cmpf olt, %92, %94 : vector<16x128xf32>
    %cst_71 = arith.constant 5.000000e-01 : f32
    %96 = vector.broadcast %cst_71 : f32 to vector<16x128xf32>
    %97 = arith.mulf %96, %83 : vector<16x128xf32>
    %98 = arith.mulf %97, %83 : vector<16x128xf32>
    %cst_72 = arith.constant 5.000000e-01 : f32
    %99 = vector.broadcast %cst_72 : f32 to vector<16x128xf32>
    %100 = arith.subf %92, %99 : vector<16x128xf32>
    %101 = arith.select %95, %98, %100 : vector<16x128xi1>, vector<16x128xf32>
    %cst_73 = arith.constant 1.000000e+00 : f32
    %102 = vector.broadcast %cst_73 : f32 to vector<16x128xf32>
    %103 = arith.cmpf olt, %93, %102 : vector<16x128xf32>
    %cst_74 = arith.constant 5.000000e-01 : f32
    %104 = vector.broadcast %cst_74 : f32 to vector<16x128xf32>
    %105 = arith.mulf %104, %85 : vector<16x128xf32>
    %106 = arith.mulf %105, %85 : vector<16x128xf32>
    %cst_75 = arith.constant 5.000000e-01 : f32
    %107 = vector.broadcast %cst_75 : f32 to vector<16x128xf32>
    %108 = arith.subf %93, %107 : vector<16x128xf32>
    %109 = arith.select %103, %106, %108 : vector<16x128xi1>, vector<16x128xf32>
    %110 = arith.addf %101, %109 : vector<16x128xf32>
    %cst_76 = arith.constant 5.000000e-01 : f32
    %111 = vector.broadcast %cst_76 : f32 to vector<16x128xf32>
    %112 = arith.cmpf ogt, %87, %111 : vector<16x128xf32>
    %113 = arith.extui %112 : vector<16x128xi1> to vector<16x128xi32>
    %114 = arith.sitofp %113 : vector<16x128xi32> to vector<16x128xf32>
    %115 = arith.mulf %114, %91 : vector<16x128xf32>
    %116 = arith.subf %91, %115 : vector<16x128xf32>
    %117 = arith.mulf %89, %91 : vector<16x128xf32>
    %118 = arith.subf %91, %117 : vector<16x128xf32>
    %c6 = arith.constant 6 : index
    %c0_77 = arith.constant 0 : index
    %c0_78 = arith.constant 0 : index
    %119 = vector.load %arg4[%c6, %c0_77, %c0_78] : memref<12x16x128xf32, #tpu.memory_space<vmem>>, vector<1x16x128xf32>
    %120 = vector.shape_cast %119 : vector<1x16x128xf32> to vector<16x128xf32>
    %121 = arith.mulf %110, %115 : vector<16x128xf32>
    %122 = arith.mulf %121, %117 : vector<16x128xf32>
    %123 = arith.addf %120, %122 : vector<16x128xf32>
    %c6_79 = arith.constant 6 : index
    %c0_80 = arith.constant 0 : index
    %c0_81 = arith.constant 0 : index
    %124 = vector.load %arg4[%c6_79, %c0_80, %c0_81] : memref<12x16x128xf32, #tpu.memory_space<vmem>>, vector<1x16x128xf32>
    %125 = vector.shape_cast %124 : vector<1x16x128xf32> to vector<16x128xf32>
    %126 = vector.shape_cast %123 : vector<16x128xf32> to vector<1x16x128xf32>
    tpu.vector_store %arg4[%c6_79, %c0_80, %c0_81], %126 {strides = array<i32>} : memref<12x16x128xf32, #tpu.memory_space<vmem>>, vector<1x16x128xf32>,
    %c7 = arith.constant 7 : index
    %c0_82 = arith.constant 0 : index
    %c0_83 = arith.constant 0 : index
    %127 = vector.load %arg4[%c7, %c0_82, %c0_83] : memref<12x16x128xf32, #tpu.memory_space<vmem>>, vector<1x16x128xf32>
    %128 = vector.shape_cast %127 : vector<1x16x128xf32> to vector<16x128xf32>
    %129 = arith.mulf %110, %115 : vector<16x128xf32>
    %130 = arith.mulf %129, %118 : vector<16x128xf32>
    %131 = arith.addf %128, %130 : vector<16x128xf32>
    %c7_84 = arith.constant 7 : index
    %c0_85 = arith.constant 0 : index
    %c0_86 = arith.constant 0 : index
    %132 = vector.load %arg4[%c7_84, %c0_85, %c0_86] : memref<12x16x128xf32, #tpu.memory_space<vmem>>, vector<1x16x128xf32>
    %133 = vector.shape_cast %132 : vector<1x16x128xf32> to vector<16x128xf32>
    %134 = vector.shape_cast %131 : vector<16x128xf32> to vector<1x16x128xf32>
    tpu.vector_store %arg4[%c7_84, %c0_85, %c0_86], %134 {strides = array<i32>} : memref<12x16x128xf32, #tpu.memory_space<vmem>>, vector<1x16x128xf32>,
    %c8 = arith.constant 8 : index
    %c0_87 = arith.constant 0 : index
    %c0_88 = arith.constant 0 : index
    %135 = vector.load %arg4[%c8, %c0_87, %c0_88] : memref<12x16x128xf32, #tpu.memory_space<vmem>>, vector<1x16x128xf32>
    %136 = vector.shape_cast %135 : vector<1x16x128xf32> to vector<16x128xf32>
    %137 = arith.mulf %110, %116 : vector<16x128xf32>
    %138 = arith.addf %136, %137 : vector<16x128xf32>
    %c8_89 = arith.constant 8 : index
    %c0_90 = arith.constant 0 : index
    %c0_91 = arith.constant 0 : index
    %139 = vector.load %arg4[%c8_89, %c0_90, %c0_91] : memref<12x16x128xf32, #tpu.memory_space<vmem>>, vector<1x16x128xf32>
    %140 = vector.shape_cast %139 : vector<1x16x128xf32> to vector<16x128xf32>
    %141 = vector.shape_cast %138 : vector<16x128xf32> to vector<1x16x128xf32>
    tpu.vector_store %arg4[%c8_89, %c0_90, %c0_91], %141 {strides = array<i32>} : memref<12x16x128xf32, #tpu.memory_space<vmem>>, vector<1x16x128xf32>,
    %c9 = arith.constant 9 : index
    %c0_92 = arith.constant 0 : index
    %c0_93 = arith.constant 0 : index
    %142 = vector.load %arg4[%c9, %c0_92, %c0_93] : memref<12x16x128xf32, #tpu.memory_space<vmem>>, vector<1x16x128xf32>
    %143 = vector.shape_cast %142 : vector<1x16x128xf32> to vector<16x128xf32>
    %144 = arith.addf %143, %117 : vector<16x128xf32>
    %c9_94 = arith.constant 9 : index
    %c0_95 = arith.constant 0 : index
    %c0_96 = arith.constant 0 : index
    %145 = vector.load %arg4[%c9_94, %c0_95, %c0_96] : memref<12x16x128xf32, #tpu.memory_space<vmem>>, vector<1x16x128xf32>
    %146 = vector.shape_cast %145 : vector<1x16x128xf32> to vector<16x128xf32>
    %147 = vector.shape_cast %144 : vector<16x128xf32> to vector<1x16x128xf32>
    tpu.vector_store %arg4[%c9_94, %c0_95, %c0_96], %147 {strides = array<i32>} : memref<12x16x128xf32, #tpu.memory_space<vmem>>, vector<1x16x128xf32>,
    %c10 = arith.constant 10 : index
    %c0_97 = arith.constant 0 : index
    %c0_98 = arith.constant 0 : index
    %148 = vector.load %arg4[%c10, %c0_97, %c0_98] : memref<12x16x128xf32, #tpu.memory_space<vmem>>, vector<1x16x128xf32>
    %149 = vector.shape_cast %148 : vector<1x16x128xf32> to vector<16x128xf32>
    %150 = arith.addf %149, %118 : vector<16x128xf32>
    %c10_99 = arith.constant 10 : index
    %c0_100 = arith.constant 0 : index
    %c0_101 = arith.constant 0 : index
    %151 = vector.load %arg4[%c10_99, %c0_100, %c0_101] : memref<12x16x128xf32, #tpu.memory_space<vmem>>, vector<1x16x128xf32>
    %152 = vector.shape_cast %151 : vector<1x16x128xf32> to vector<16x128xf32>
    %153 = vector.shape_cast %150 : vector<16x128xf32> to vector<1x16x128xf32>
    tpu.vector_store %arg4[%c10_99, %c0_100, %c0_101], %153 {strides = array<i32>} : memref<12x16x128xf32, #tpu.memory_space<vmem>>, vector<1x16x128xf32>,
    %c11 = arith.constant 11 : index
    %c0_102 = arith.constant 0 : index
    %c0_103 = arith.constant 0 : index
    %154 = vector.load %arg4[%c11, %c0_102, %c0_103] : memref<12x16x128xf32, #tpu.memory_space<vmem>>, vector<1x16x128xf32>
    %155 = vector.shape_cast %154 : vector<1x16x128xf32> to vector<16x128xf32>
    %156 = arith.addf %155, %116 : vector<16x128xf32>
    %c11_104 = arith.constant 11 : index
    %c0_105 = arith.constant 0 : index
    %c0_106 = arith.constant 0 : index
    %157 = vector.load %arg4[%c11_104, %c0_105, %c0_106] : memref<12x16x128xf32, #tpu.memory_space<vmem>>, vector<1x16x128xf32>
    %158 = vector.shape_cast %157 : vector<1x16x128xf32> to vector<16x128xf32>
    %159 = vector.shape_cast %156 : vector<16x128xf32> to vector<1x16x128xf32>
    tpu.vector_store %arg4[%c11_104, %c0_105, %c0_106], %159 {strides = array<i32>} : memref<12x16x128xf32, #tpu.memory_space<vmem>>, vector<1x16x128xf32>,
    %c0_i32_107 = arith.constant 0 : i32
    %160 = arith.cmpi eq, %arg0, %c0_i32_107 : i32
    %161 = arith.extui %160 : i1 to i32
    %c0_i32_108 = arith.constant 0 : i32
    %162 = arith.cmpi ne, %161, %c0_i32_108 : i32
    scf.if %162 {
      %c0_109 = arith.constant 0 : index
      %c0_110 = arith.constant 0 : index
      %c0_111 = arith.constant 0 : index
      %163 = vector.load %arg4[%c0_109, %c0_110, %c0_111] : memref<12x16x128xf32, #tpu.memory_space<vmem>>, vector<1x16x128xf32>
      %164 = vector.shape_cast %163 : vector<1x16x128xf32> to vector<16x128xf32>
      %165 = vector.shape_cast %164 : vector<16x128xf32> to vector<1x16x128xf32>
      %cst_112 = arith.constant dense<0.000000e+00> : vector<1xf32>
      %166 = vector.multi_reduction <add>, %165, %cst_112 [1, 2] : vector<1x16x128xf32> to vector<1xf32>
      %167 = vector.shape_cast %166 : vector<1xf32> to vector<1x1x1xf32>
      %168 = vector.extract %167[0, 0, 0] : f32 from vector<1x1x1xf32>
      %c1_113 = arith.constant 1 : index
      %c0_114 = arith.constant 0 : index
      %c0_115 = arith.constant 0 : index
      %169 = vector.load %arg4[%c1_113, %c0_114, %c0_115] : memref<12x16x128xf32, #tpu.memory_space<vmem>>, vector<1x16x128xf32>
      %170 = vector.shape_cast %169 : vector<1x16x128xf32> to vector<16x128xf32>
      %171 = vector.shape_cast %170 : vector<16x128xf32> to vector<1x16x128xf32>
      %cst_116 = arith.constant dense<0.000000e+00> : vector<1xf32>
      %172 = vector.multi_reduction <add>, %171, %cst_116 [1, 2] : vector<1x16x128xf32> to vector<1xf32>
      %173 = vector.shape_cast %172 : vector<1xf32> to vector<1x1x1xf32>
      %174 = vector.extract %173[0, 0, 0] : f32 from vector<1x1x1xf32>
      %c2_117 = arith.constant 2 : index
      %c0_118 = arith.constant 0 : index
      %c0_119 = arith.constant 0 : index
      %175 = vector.load %arg4[%c2_117, %c0_118, %c0_119] : memref<12x16x128xf32, #tpu.memory_space<vmem>>, vector<1x16x128xf32>
      %176 = vector.shape_cast %175 : vector<1x16x128xf32> to vector<16x128xf32>
      %177 = vector.shape_cast %176 : vector<16x128xf32> to vector<1x16x128xf32>
      %cst_120 = arith.constant dense<0.000000e+00> : vector<1xf32>
      %178 = vector.multi_reduction <add>, %177, %cst_120 [1, 2] : vector<1x16x128xf32> to vector<1xf32>
      %179 = vector.shape_cast %178 : vector<1xf32> to vector<1x1x1xf32>
      %180 = vector.extract %179[0, 0, 0] : f32 from vector<1x1x1xf32>
      %c3_121 = arith.constant 3 : index
      %c0_122 = arith.constant 0 : index
      %c0_123 = arith.constant 0 : index
      %181 = vector.load %arg4[%c3_121, %c0_122, %c0_123] : memref<12x16x128xf32, #tpu.memory_space<vmem>>, vector<1x16x128xf32>
      %182 = vector.shape_cast %181 : vector<1x16x128xf32> to vector<16x128xf32>
      %183 = vector.shape_cast %182 : vector<16x128xf32> to vector<1x16x128xf32>
      %cst_124 = arith.constant dense<0.000000e+00> : vector<1xf32>
      %184 = vector.multi_reduction <add>, %183, %cst_124 [1, 2] : vector<1x16x128xf32> to vector<1xf32>
      %185 = vector.shape_cast %184 : vector<1xf32> to vector<1x1x1xf32>
      %186 = vector.extract %185[0, 0, 0] : f32 from vector<1x1x1xf32>
      %c4_125 = arith.constant 4 : index
      %c0_126 = arith.constant 0 : index
      %c0_127 = arith.constant 0 : index
      %187 = vector.load %arg4[%c4_125, %c0_126, %c0_127] : memref<12x16x128xf32, #tpu.memory_space<vmem>>, vector<1x16x128xf32>
      %188 = vector.shape_cast %187 : vector<1x16x128xf32> to vector<16x128xf32>
      %189 = vector.shape_cast %188 : vector<16x128xf32> to vector<1x16x128xf32>
      %cst_128 = arith.constant dense<0.000000e+00> : vector<1xf32>
      %190 = vector.multi_reduction <add>, %189, %cst_128 [1, 2] : vector<1x16x128xf32> to vector<1xf32>
      %191 = vector.shape_cast %190 : vector<1xf32> to vector<1x1x1xf32>
      %192 = vector.extract %191[0, 0, 0] : f32 from vector<1x1x1xf32>
      %c5_129 = arith.constant 5 : index
      %c0_130 = arith.constant 0 : index
      %c0_131 = arith.constant 0 : index
      %193 = vector.load %arg4[%c5_129, %c0_130, %c0_131] : memref<12x16x128xf32, #tpu.memory_space<vmem>>, vector<1x16x128xf32>
      %194 = vector.shape_cast %193 : vector<1x16x128xf32> to vector<16x128xf32>
      %195 = vector.shape_cast %194 : vector<16x128xf32> to vector<1x16x128xf32>
      %cst_132 = arith.constant dense<0.000000e+00> : vector<1xf32>
      %196 = vector.multi_reduction <add>, %195, %cst_132 [1, 2] : vector<1x16x128xf32> to vector<1xf32>
      %197 = vector.shape_cast %196 : vector<1xf32> to vector<1x1x1xf32>
      %198 = vector.extract %197[0, 0, 0] : f32 from vector<1x1x1xf32>
      %c6_133 = arith.constant 6 : index
      %c0_134 = arith.constant 0 : index
      %c0_135 = arith.constant 0 : index
      %199 = vector.load %arg4[%c6_133, %c0_134, %c0_135] : memref<12x16x128xf32, #tpu.memory_space<vmem>>, vector<1x16x128xf32>
      %200 = vector.shape_cast %199 : vector<1x16x128xf32> to vector<16x128xf32>
      %201 = vector.shape_cast %200 : vector<16x128xf32> to vector<1x16x128xf32>
      %cst_136 = arith.constant dense<0.000000e+00> : vector<1xf32>
      %202 = vector.multi_reduction <add>, %201, %cst_136 [1, 2] : vector<1x16x128xf32> to vector<1xf32>
      %203 = vector.shape_cast %202 : vector<1xf32> to vector<1x1x1xf32>
      %204 = vector.extract %203[0, 0, 0] : f32 from vector<1x1x1xf32>
      %c7_137 = arith.constant 7 : index
      %c0_138 = arith.constant 0 : index
      %c0_139 = arith.constant 0 : index
      %205 = vector.load %arg4[%c7_137, %c0_138, %c0_139] : memref<12x16x128xf32, #tpu.memory_space<vmem>>, vector<1x16x128xf32>
      %206 = vector.shape_cast %205 : vector<1x16x128xf32> to vector<16x128xf32>
      %207 = vector.shape_cast %206 : vector<16x128xf32> to vector<1x16x128xf32>
      %cst_140 = arith.constant dense<0.000000e+00> : vector<1xf32>
      %208 = vector.multi_reduction <add>, %207, %cst_140 [1, 2] : vector<1x16x128xf32> to vector<1xf32>
      %209 = vector.shape_cast %208 : vector<1xf32> to vector<1x1x1xf32>
      %210 = vector.extract %209[0, 0, 0] : f32 from vector<1x1x1xf32>
      %c8_141 = arith.constant 8 : index
      %c0_142 = arith.constant 0 : index
      %c0_143 = arith.constant 0 : index
      %211 = vector.load %arg4[%c8_141, %c0_142, %c0_143] : memref<12x16x128xf32, #tpu.memory_space<vmem>>, vector<1x16x128xf32>
      %212 = vector.shape_cast %211 : vector<1x16x128xf32> to vector<16x128xf32>
      %213 = vector.shape_cast %212 : vector<16x128xf32> to vector<1x16x128xf32>
      %cst_144 = arith.constant dense<0.000000e+00> : vector<1xf32>
      %214 = vector.multi_reduction <add>, %213, %cst_144 [1, 2] : vector<1x16x128xf32> to vector<1xf32>
      %215 = vector.shape_cast %214 : vector<1xf32> to vector<1x1x1xf32>
      %216 = vector.extract %215[0, 0, 0] : f32 from vector<1x1x1xf32>
      %c9_145 = arith.constant 9 : index
      %c0_146 = arith.constant 0 : index
      %c0_147 = arith.constant 0 : index
      %217 = vector.load %arg4[%c9_145, %c0_146, %c0_147] : memref<12x16x128xf32, #tpu.memory_space<vmem>>, vector<1x16x128xf32>
      %218 = vector.shape_cast %217 : vector<1x16x128xf32> to vector<16x128xf32>
      %219 = vector.shape_cast %218 : vector<16x128xf32> to vector<1x16x128xf32>
      %cst_148 = arith.constant dense<0.000000e+00> : vector<1xf32>
      %220 = vector.multi_reduction <add>, %219, %cst_148 [1, 2] : vector<1x16x128xf32> to vector<1xf32>
      %221 = vector.shape_cast %220 : vector<1xf32> to vector<1x1x1xf32>
      %222 = vector.extract %221[0, 0, 0] : f32 from vector<1x1x1xf32>
      %c10_149 = arith.constant 10 : index
      %c0_150 = arith.constant 0 : index
      %c0_151 = arith.constant 0 : index
      %223 = vector.load %arg4[%c10_149, %c0_150, %c0_151] : memref<12x16x128xf32, #tpu.memory_space<vmem>>, vector<1x16x128xf32>
      %224 = vector.shape_cast %223 : vector<1x16x128xf32> to vector<16x128xf32>
      %225 = vector.shape_cast %224 : vector<16x128xf32> to vector<1x16x128xf32>
      %cst_152 = arith.constant dense<0.000000e+00> : vector<1xf32>
      %226 = vector.multi_reduction <add>, %225, %cst_152 [1, 2] : vector<1x16x128xf32> to vector<1xf32>
      %227 = vector.shape_cast %226 : vector<1xf32> to vector<1x1x1xf32>
      %228 = vector.extract %227[0, 0, 0] : f32 from vector<1x1x1xf32>
      %c11_153 = arith.constant 11 : index
      %c0_154 = arith.constant 0 : index
      %c0_155 = arith.constant 0 : index
      %229 = vector.load %arg4[%c11_153, %c0_154, %c0_155] : memref<12x16x128xf32, #tpu.memory_space<vmem>>, vector<1x16x128xf32>
      %230 = vector.shape_cast %229 : vector<1x16x128xf32> to vector<16x128xf32>
      %231 = vector.shape_cast %230 : vector<16x128xf32> to vector<1x16x128xf32>
      %cst_156 = arith.constant dense<0.000000e+00> : vector<1xf32>
      %232 = vector.multi_reduction <add>, %231, %cst_156 [1, 2] : vector<1x16x128xf32> to vector<1xf32>
      %233 = vector.shape_cast %232 : vector<1xf32> to vector<1x1x1xf32>
      %234 = vector.extract %233[0, 0, 0] : f32 from vector<1x1x1xf32>
      %cst_157 = arith.constant 9.99999974E-6 : f32
      %235 = arith.addf %186, %cst_157 : f32
      %236 = arith.divf %168, %235 : f32
      %cst_158 = arith.constant 9.99999974E-6 : f32
      %237 = arith.addf %192, %cst_158 : f32
      %238 = arith.divf %174, %237 : f32
      %239 = arith.addf %236, %238 : f32
      %cst_159 = arith.constant 9.99999974E-6 : f32
      %240 = arith.addf %198, %cst_159 : f32
      %241 = arith.divf %180, %240 : f32
      %242 = arith.addf %239, %241 : f32
      %cst_160 = arith.constant 9.99999974E-6 : f32
      %243 = arith.addf %222, %cst_160 : f32
      %244 = arith.divf %204, %243 : f32
      %cst_161 = arith.constant 9.99999974E-6 : f32
      %245 = arith.addf %228, %cst_161 : f32
      %246 = arith.divf %210, %245 : f32
      %247 = arith.addf %244, %246 : f32
      %cst_162 = arith.constant 9.99999974E-6 : f32
      %248 = arith.addf %234, %cst_162 : f32
      %249 = arith.divf %216, %248 : f32
      %250 = arith.addf %247, %249 : f32
      %c0_163 = arith.constant 0 : index
      %c0_164 = arith.constant 0 : index
      %251 = memref.load %arg3[%c0_163, %c0_164] : memref<1x2xf32, #tpu.memory_space<smem>>
      memref.store %242, %arg3[%c0_163, %c0_164] : memref<1x2xf32, #tpu.memory_space<smem>>
      %c0_165 = arith.constant 0 : index
      %c1_166 = arith.constant 1 : index
      %252 = memref.load %arg3[%c0_165, %c1_166] : memref<1x2xf32, #tpu.memory_space<smem>>
      memref.store %250, %arg3[%c0_165, %c1_166] : memref<1x2xf32, #tpu.memory_space<smem>>
    } else {
    }
    return
  }
  func.func @transform_0(%arg0: i32) -> (i32, i32, i32) {
    %c0_i32 = arith.constant 0 : i32
    %c0_i32_0 = arith.constant 0 : i32
    %c0_i32_1 = arith.constant 0 : i32
    return %c0_i32, %arg0, %c0_i32_0 : i32, i32, i32
  }
  func.func @transform_1(%arg0: i32) -> (i32, i32, i32) {
    %c0_i32 = arith.constant 0 : i32
    %c0_i32_0 = arith.constant 0 : i32
    %c0_i32_1 = arith.constant 0 : i32
    return %c0_i32, %arg0, %c0_i32_0 : i32, i32, i32
  }
  func.func @transform_2(%arg0: i32) -> (i32, i32) {
    %c0_i32 = arith.constant 0 : i32
    %c0_i32_0 = arith.constant 0 : i32
    %c0_i32_1 = arith.constant 0 : i32
    return %c0_i32, %c0_i32_0 : i32, i32
  }
}

</mosaic_0001>

<llo_original>
// kernel: _criterion_impl.1
$region0: #{_criterion_impl.1}
  #allocation0 [shape = 'u32[]', space=smem, size = 0x4, offset = 0x4, fixed_abs, tag = 'smem constant byte address 0x4 - core index']
  #allocation1 [shape = 'u32[72,128]{1,0:T(1,128)}', space=vmem, size = 0x9000, scoped, tag = 'internal scratch']
  #allocation2 [shape = 'f32[12,16,128]{2,1,0:T(8,128)}', space=vmem, size = 0x18000, scoped, tag = 'scratch operand']
  %s0 = inlined_call_operand.vmem [shape: f32[6,16,128], index: 0, kind: input, shape index: {}]
  %s1 = inlined_call_operand.vmem [shape: f32[5,16,128], index: 1, kind: input, shape index: {}]
  %s2 = inlined_call_operand.vmem [shape: f32[1,2], index: 2, kind: output, shape index: {}]
  %s3 = sld [smem:[#allocation0]]
  $region26: #{_criterion_impl.1} parent=0
    _
  %s5 = ssub.s32 1, %s3
  %s6 = scalar_select 0, %s5, %s3
  $region1: #{_criterion_impl.1} parent=0
    #allocation3 [shape = 'u8[512]{0}', space=smem, size = 0x200, scoped, tag = 'output window, operand 0, single buffered']
    #allocation4 [shape = 's32[1]{0}', space=sflag, size = 0x4, scoped, tag = 'scoped memory for _criterion_impl.1']
    %7 = vsyncpa [#allocation4], 0
    // Predicated region
    $region2: #{_criterion_impl.1} parent=1 // pred_check
      _
    $region3: #{_criterion_impl.1} parent=1 // pred_check_branch
      %9 = sbr.rel (0) target = $region5
    $region4: #{_criterion_impl.1} parent=1 // pred_region
      _
    $region5: #{_criterion_impl.1} parent=1 // pred_fallthru
      _
    // Predicated region
    $region6: #{_criterion_impl.1} parent=1 // pred_check
      _
    $region7: #{_criterion_impl.1} parent=1 // pred_check_branch
      %11 = sbr.rel (0) target = $region9
    $region8: #{_criterion_impl.1} parent=1 // pred_region
      _
    $region9: #{_criterion_impl.1} parent=1 // pred_fallthru
      _
    %p12 = scmp.eq.s32.totalorder 0, 0
    // Predicated region
    $region10: #{_criterion_impl.1} parent=1 // pred_check
      %p13 = pneg %p12
    $region11: #{_criterion_impl.1} parent=1 // pred_check_branch
      %15 = sbr.rel (%p13) target = $region13
    $region12: #{_criterion_impl.1} parent=1 // pred_region
      %16 = vst [vmem:[#allocation2] sm:$0xff] 0.0
      %17 = vst [vmem:[#allocation2 + $0x8] sm:$0xff] 0.0
      %18 = vst [vmem:[#allocation2 + $0x10] sm:$0xff] 0.0
      %19 = vst [vmem:[#allocation2 + $0x18] sm:$0xff] 0.0
      %20 = vst [vmem:[#allocation2 + $0x20] sm:$0xff] 0.0
      %21 = vst [vmem:[#allocation2 + $0x28] sm:$0xff] 0.0
      %22 = vst [vmem:[#allocation2 + $0x30] sm:$0xff] 0.0
      %23 = vst [vmem:[#allocation2 + $0x38] sm:$0xff] 0.0
      %24 = vst [vmem:[#allocation2 + $0x40] sm:$0xff] 0.0
      %25 = vst [vmem:[#allocation2 + $0x48] sm:$0xff] 0.0
      %26 = vst [vmem:[#allocation2 + $0x50] sm:$0xff] 0.0
      %27 = vst [vmem:[#allocation2 + $0x58] sm:$0xff] 0.0
      %28 = vst [vmem:[#allocation2 + $0x60] sm:$0xff] 0.0
      %29 = vst [vmem:[#allocation2 + $0x68] sm:$0xff] 0.0
      %30 = vst [vmem:[#allocation2 + $0x70] sm:$0xff] 0.0
      %31 = vst [vmem:[#allocation2 + $0x78] sm:$0xff] 0.0
      %32 = vst [vmem:[#allocation2 + $0x80] sm:$0xff] 0.0
      %33 = vst [vmem:[#allocation2 + $0x88] sm:$0xff] 0.0
      %34 = vst [vmem:[#allocation2 + $0x90] sm:$0xff] 0.0
      %35 = vst [vmem:[#allocation2 + $0x98] sm:$0xff] 0.0
      %36 = vst [vmem:[#allocation2 + $0xa0] sm:$0xff] 0.0
      %37 = vst [vmem:[#allocation2 + $0xa8] sm:$0xff] 0.0
      %38 = vst [vmem:[#allocation2 + $0xb0] sm:$0xff] 0.0
      %39 = vst [vmem:[#allocation2 + $0xb8] sm:$0xff] 0.0
    $region13: #{_criterion_impl.1} parent=1 // pred_fallthru
      _
    %v40 = vld [vmem:[%s0] sm:$0xff]
    %v41 = vld [vmem:[%s0 + $0x8] sm:$0xff]
    %s42 = scalar_lea.vmem %s0, 16
    %v43 = vld [vmem:[%s42] sm:$0xff]
    %v44 = vld [vmem:[%s42 + $0x8] sm:$0xff]
    %s45 = scalar_lea.vmem %s0, 32
    %v46 = vld [vmem:[%s45] sm:$0xff]
    %v47 = vld [vmem:[%s45 + $0x8] sm:$0xff]
    %s48 = scalar_lea.vmem %s0, 48
    %v49 = vld [vmem:[%s48] sm:$0xff]
    %v50 = vld [vmem:[%s48 + $0x8] sm:$0xff]
    %s51 = scalar_lea.vmem %s0, 64
    %v52 = vld [vmem:[%s51] sm:$0xff]
    %v53 = vld [vmem:[%s51 + $0x8] sm:$0xff]
    %s54 = scalar_lea.vmem %s0, 80
    %v55 = vld [vmem:[%s54] sm:$0xff]
    %v56 = vld [vmem:[%s54 + $0x8] sm:$0xff]
    %vm57 = vcmp.gt.f32.partialorder %v46, 0.5
    %vm58 = vcmp.gt.f32.partialorder %v47, 0.5
    %v59 = vsel %vm57, %v43, %v40
    %v60 = vsel %vm58, %v44, %v41
    %v61 = vmax.f32 %v40, %v43
    %v62 = vmax.f32 %v41, %v44
    %v63 = vsub.f32 %v40, %v43
    %v64 = vsub.f32 %v41, %v44
    %v65 = vand.u32 2147483647, %v63
    %v66 = vand.u32 2147483647, %v64
    %v67 = vsub.f32 0.0, %v65
    %v68 = vsub.f32 0.0, %v66
    %v69 = vmul.f32 %v67, 1.442695
    %v70 = vpow.pop %v69
    %v71 = vmul.f32 %v68, 1.442695
    %v72 = vpow.pop %v71
    %v73 = vadd.f32 %v70, 1.0
    %v74 = vadd.f32 %v72, 1.0
    %v75 = vlog2.pop %v73
    %v76 = vmul.f32 %v75, 0.6931472
    %v77 = vlog2.pop %v74
    %v78 = vmul.f32 %v77, 0.6931472
    %v79 = vadd.f32 %v61, %v76
    %v80 = vadd.f32 %v62, %v78
    %v81 = vsub.f32 %v79, %v59
    %v82 = vsub.f32 %v80, %v60
    %v83 = vsel %vm57, 1.0, 0.5
    %v84 = vsel %vm58, 1.0, 0.5
    %v85 = vmul.f32 %v83, %v55
    %v86 = vmul.f32 %v84, %v56
    %vm87 = vcmp.gt.f32.partialorder %v49, 0.5
    %vm88 = vcmp.gt.f32.partialorder %v50, 0.5
    %v89 = vsel %vm87, 1, 0
    %v90 = vsel %vm88, 1, 0
    %v91 = vcvt.s32.f32 %v89
    %v92 = vcvt.s32.f32 %v90
    %v93 = vmul.f32 %v85, %v91
    %v94 = vmul.f32 %v86, %v92
    %v95 = vsub.f32 %v85, %v93
    %v96 = vsub.f32 %v86, %v94
    %v97 = vmul.f32 %v93, %v52
    %v98 = vmul.f32 %v94, %v53
    %v99 = vsub.f32 %v93, %v97
    %v100 = vsub.f32 %v94, %v98
    %v101 = vld [vmem:[#allocation2] sm:$0xff]
    %v102 = vld [vmem:[#allocation2 + $0x8] sm:$0xff]
    %v103 = vmul.f32 %v81, %v97
    %v104 = vmul.f32 %v82, %v98
    %v105 = vadd.f32 %v101, %v103
    %v106 = vadd.f32 %v102, %v104
    %107 = vst [vmem:[#allocation2] sm:$0xff] %v105
    %108 = vst [vmem:[#allocation2 + $0x8] sm:$0xff] %v106
    %s109 = scalar_lea.vmem [#allocation2], 16
    %v110 = vld [vmem:[%s109] sm:$0xff]
    %v111 = vld [vmem:[%s109 + $0x8] sm:$0xff]
    %v112 = vmul.f32 %v81, %v99
    %v113 = vmul.f32 %v82, %v100
    %v114 = vadd.f32 %v110, %v112
    %v115 = vadd.f32 %v111, %v113
    %116 = vst [vmem:[%s109] sm:$0xff] %v114
    %117 = vst [vmem:[%s109 + $0x8] sm:$0xff] %v115
    %s118 = scalar_lea.vmem [#allocation2], 32
    %v119 = vld [vmem:[%s118] sm:$0xff]
    %v120 = vld [vmem:[%s118 + $0x8] sm:$0xff]
    %v121 = vmul.f32 %v81, %v95
    %v122 = vmul.f32 %v82, %v96
    %v123 = vadd.f32 %v119, %v121
    %v124 = vadd.f32 %v120, %v122
    %125 = vst [vmem:[%s118] sm:$0xff] %v123
    %126 = vst [vmem:[%s118 + $0x8] sm:$0xff] %v124
    %s127 = scalar_lea.vmem [#allocation2], 48
    %v128 = vld [vmem:[%s127] sm:$0xff]
    %v129 = vld [vmem:[%s127 + $0x8] sm:$0xff]
    %v130 = vadd.f32 %v128, %v97
    %v131 = vadd.f32 %v129, %v98
    %132 = vst [vmem:[%s127] sm:$0xff] %v130
    %133 = vst [vmem:[%s127 + $0x8] sm:$0xff] %v131
    %s134 = scalar_lea.vmem [#allocation2], 64
    %v135 = vld [vmem:[%s134] sm:$0xff]
    %v136 = vld [vmem:[%s134 + $0x8] sm:$0xff]
    %v137 = vadd.f32 %v135, %v99
    %v138 = vadd.f32 %v136, %v100
    %139 = vst [vmem:[%s134] sm:$0xff] %v137
    %140 = vst [vmem:[%s134 + $0x8] sm:$0xff] %v138
    %s141 = scalar_lea.vmem [#allocation2], 80
    %v142 = vld [vmem:[%s141] sm:$0xff]
    %v143 = vld [vmem:[%s141 + $0x8] sm:$0xff]
    %v144 = vadd.f32 %v142, %v95
    %v145 = vadd.f32 %v143, %v96
    %146 = vst [vmem:[%s141] sm:$0xff] %v144
    %147 = vst [vmem:[%s141 + $0x8] sm:$0xff] %v145
    %v148 = vld [vmem:[%s1] sm:$0xff]
    %v149 = vld [vmem:[%s1 + $0x8] sm:$0xff]
    %s150 = scalar_lea.vmem %s1, 16
    %v151 = vld [vmem:[%s150] sm:$0xff]
    %v152 = vld [vmem:[%s150 + $0x8] sm:$0xff]
    %s153 = scalar_lea.vmem %s1, 32
    %v154 = vld [vmem:[%s153] sm:$0xff]
    %v155 = vld [vmem:[%s153 + $0x8] sm:$0xff]
    %s156 = scalar_lea.vmem %s1, 48
    %v157 = vld [vmem:[%s156] sm:$0xff]
    %v158 = vld [vmem:[%s156 + $0x8] sm:$0xff]
    %s159 = scalar_lea.vmem %s1, 64
    %v160 = vld [vmem:[%s159] sm:$0xff]
    %v161 = vld [vmem:[%s159 + $0x8] sm:$0xff]
    %v162 = vand.u32 2147483647, %v148
    %v163 = vand.u32 2147483647, %v149
    %v164 = vand.u32 2147483647, %v151
    %v165 = vand.u32 2147483647, %v152
    %vm166 = vcmp.lt.f32.partialorder %v162, 1.0
    %vm167 = vcmp.lt.f32.partialorder %v163, 1.0
    %v168 = vmul.f32 %v148, 0.5
    %v169 = vmul.f32 %v149, 0.5
    %v170 = vmul.f32 %v168, %v148
    %v171 = vmul.f32 %v169, %v149
    %v172 = vsub.f32 %v162, 0.5
    %v173 = vsub.f32 %v163, 0.5
    %v174 = vsel %vm166, %v170, %v172
    %v175 = vsel %vm167, %v171, %v173
    %vm176 = vcmp.lt.f32.partialorder %v164, 1.0
    %vm177 = vcmp.lt.f32.partialorder %v165, 1.0
    %v178 = vmul.f32 %v151, 0.5
    %v179 = vmul.f32 %v152, 0.5
    %v180 = vmul.f32 %v178, %v151
    %v181 = vmul.f32 %v179, %v152
    %v182 = vsub.f32 %v164, 0.5
    %v183 = vsub.f32 %v165, 0.5
    %v184 = vsel %vm176, %v180, %v182
    %v185 = vsel %vm177, %v181, %v183
    %v186 = vadd.f32 %v174, %v184
    %v187 = vadd.f32 %v175, %v185
    %vm188 = vcmp.gt.f32.partialorder %v154, 0.5
    %vm189 = vcmp.gt.f32.partialorder %v155, 0.5
    %v190 = vsel %vm188, 1, 0
    %v191 = vsel %vm189, 1, 0
    %v192 = vcvt.s32.f32 %v190
    %v193 = vcvt.s32.f32 %v191
    %v194 = vmul.f32 %v192, %v160
    %v195 = vmul.f32 %v193, %v161
    %v196 = vsub.f32 %v160, %v194
    %v197 = vsub.f32 %v161, %v195
    %v198 = vmul.f32 %v157, %v160
    %v199 = vmul.f32 %v158, %v161
    %v200 = vsub.f32 %v160, %v198
    %v201 = vsub.f32 %v161, %v199
    %s202 = scalar_lea.vmem [#allocation2], 96
    %v203 = vld [vmem:[%s202] sm:$0xff]
    %v204 = vld [vmem:[%s202 + $0x8] sm:$0xff]
    %v205 = vmul.f32 %v186, %v194
    %v206 = vmul.f32 %v187, %v195
    %v207 = vmul.f32 %v205, %v198
    %v208 = vmul.f32 %v206, %v199
    %v209 = vadd.f32 %v203, %v207
    %v210 = vadd.f32 %v204, %v208
    %211 = vst [vmem:[%s202] sm:$0xff] %v209
    %212 = vst [vmem:[%s202 + $0x8] sm:$0xff] %v210
    %s213 = scalar_lea.vmem [#allocation2], 112
    %v214 = vld [vmem:[%s213] sm:$0xff]
    %v215 = vld [vmem:[%s213 + $0x8] sm:$0xff]
    %v216 = vmul.f32 %v205, %v200
    %v217 = vmul.f32 %v206, %v201
    %v218 = vadd.f32 %v214, %v216
    %v219 = vadd.f32 %v215, %v217
    %220 = vst [vmem:[%s213] sm:$0xff] %v218
    %221 = vst [vmem:[%s213 + $0x8] sm:$0xff] %v219
    %s222 = scalar_lea.vmem [#allocation2], 128
    %v223 = vld [vmem:[%s222] sm:$0xff]
    %v224 = vld [vmem:[%s222 + $0x8] sm:$0xff]
    %v225 = vmul.f32 %v186, %v196
    %v226 = vmul.f32 %v187, %v197
    %v227 = vadd.f32 %v223, %v225
    %v228 = vadd.f32 %v224, %v226
    %229 = vst [vmem:[%s222] sm:$0xff] %v227
    %230 = vst [vmem:[%s222 + $0x8] sm:$0xff] %v228
    %s231 = scalar_lea.vmem [#allocation2], 144
    %v232 = vld [vmem:[%s231] sm:$0xff]
    %v233 = vld [vmem:[%s231 + $0x8] sm:$0xff]
    %v234 = vadd.f32 %v232, %v198
    %v235 = vadd.f32 %v233, %v199
    %236 = vst [vmem:[%s231] sm:$0xff] %v234
    %237 = vst [vmem:[%s231 + $0x8] sm:$0xff] %v235
    %s238 = scalar_lea.vmem [#allocation2], 160
    %v239 = vld [vmem:[%s238] sm:$0xff]
    %v240 = vld [vmem:[%s238 + $0x8] sm:$0xff]
    %v241 = vadd.f32 %v239, %v200
    %v242 = vadd.f32 %v240, %v201
    %243 = vst [vmem:[%s238] sm:$0xff] %v241
    %244 = vst [vmem:[%s238 + $0x8] sm:$0xff] %v242
    %s245 = scalar_lea.vmem [#allocation2], 176
    %v246 = vld [vmem:[%s245] sm:$0xff]
    %v247 = vld [vmem:[%s245 + $0x8] sm:$0xff]
    %v248 = vadd.f32 %v246, %v196
    %v249 = vadd.f32 %v247, %v197
    %250 = vst [vmem:[%s245] sm:$0xff] %v248
    %251 = vst [vmem:[%s245 + $0x8] sm:$0xff] %v249
    // Predicated region
    $region14: #{_criterion_impl.1} parent=1 // pred_check
      %p252 = pneg %p12
    $region15: #{_criterion_impl.1} parent=1 // pred_check_branch
      %254 = sbr.rel (%p252) target = $region17
    $region16: #{_criterion_impl.1} parent=1 // pred_region
      %v255 = vld [vmem:[#allocation2] sm:$0xff]
      %v256 = vld [vmem:[#allocation2 + $0x8] sm:$0xff]
      %v257 = vadd.f32 %v255, %v256
      %258 = vadd.xlane.f32.xlu0 %v257
      %v259 = vpop.xlane.xlu0 %258
      %v260 = vrot.slane %v259, 4
      %v261 = vadd.f32 %v259, %v260
      %v262 = vrot.slane %v261, 2
      %v263 = vadd.f32 %v261, %v262
      %v264 = vrot.slane %v263, 1
      %v265 = vadd.f32 %v263, %v264
      %s266 = vtos %v265
      %v267 = vld [vmem:[%s109] sm:$0xff]
      %v268 = vld [vmem:[%s109 + $0x8] sm:$0xff]
      %v269 = vadd.f32 %v267, %v268
      %270 = vadd.xlane.f32.xlu0 %v269
      %v271 = vpop.xlane.xlu0 %270
      %v272 = vrot.slane %v271, 4
      %v273 = vadd.f32 %v271, %v272
      %v274 = vrot.slane %v273, 2
      %v275 = vadd.f32 %v273, %v274
      %v276 = vrot.slane %v275, 1
      %v277 = vadd.f32 %v275, %v276
      %s278 = vtos %v277
      %v279 = vld [vmem:[%s118] sm:$0xff]
      %v280 = vld [vmem:[%s118 + $0x8] sm:$0xff]
      %v281 = vadd.f32 %v279, %v280
      %282 = vadd.xlane.f32.xlu0 %v281
      %v283 = vpop.xlane.xlu0 %282
      %v284 = vrot.slane %v283, 4
      %v285 = vadd.f32 %v283, %v284
      %v286 = vrot.slane %v285, 2
      %v287 = vadd.f32 %v285, %v286
      %v288 = vrot.slane %v287, 1
      %v289 = vadd.f32 %v287, %v288
      %s290 = vtos %v289
      %v291 = vld [vmem:[%s127] sm:$0xff]
      %v292 = vld [vmem:[%s127 + $0x8] sm:$0xff]
      %v293 = vadd.f32 %v291, %v292
      %294 = vadd.xlane.f32.xlu0 %v293
      %v295 = vpop.xlane.xlu0 %294
      %v296 = vrot.slane %v295, 4
      %v297 = vadd.f32 %v295, %v296
      %v298 = vrot.slane %v297, 2
      %v299 = vadd.f32 %v297, %v298
      %v300 = vrot.slane %v299, 1
      %v301 = vadd.f32 %v299, %v300
      %s302 = vtos %v301
      %v303 = vld [vmem:[%s134] sm:$0xff]
      %v304 = vld [vmem:[%s134 + $0x8] sm:$0xff]
      %v305 = vadd.f32 %v303, %v304
      %306 = vadd.xlane.f32.xlu0 %v305
      %v307 = vpop.xlane.xlu0 %306
      %v308 = vrot.slane %v307, 4
      %v309 = vadd.f32 %v307, %v308
      %v310 = vrot.slane %v309, 2
      %v311 = vadd.f32 %v309, %v310
      %v312 = vrot.slane %v311, 1
      %v313 = vadd.f32 %v311, %v312
      %s314 = vtos %v313
      %v315 = vld [vmem:[%s141] sm:$0xff]
      %v316 = vld [vmem:[%s141 + $0x8] sm:$0xff]
      %v317 = vadd.f32 %v315, %v316
      %318 = vadd.xlane.f32.xlu0 %v317
      %v319 = vpop.xlane.xlu0 %318
      %v320 = vrot.slane %v319, 4
      %v321 = vadd.f32 %v319, %v320
      %v322 = vrot.slane %v321, 2
      %v323 = vadd.f32 %v321, %v322
      %v324 = vrot.slane %v323, 1
      %v325 = vadd.f32 %v323, %v324
      %s326 = vtos %v325
      %v327 = vld [vmem:[%s202] sm:$0xff]
      %v328 = vld [vmem:[%s202 + $0x8] sm:$0xff]
      %v329 = vadd.f32 %v327, %v328
      %330 = vadd.xlane.f32.xlu0 %v329
      %v331 = vpop.xlane.xlu0 %330
      %v332 = vrot.slane %v331, 4
      %v333 = vadd.f32 %v331, %v332
      %v334 = vrot.slane %v333, 2
      %v335 = vadd.f32 %v333, %v334
      %v336 = vrot.slane %v335, 1
      %v337 = vadd.f32 %v335, %v336
      %s338 = vtos %v337
      %v339 = vld [vmem:[%s213] sm:$0xff]
      %v340 = vld [vmem:[%s213 + $0x8] sm:$0xff]
      %v341 = vadd.f32 %v339, %v340
      %342 = vadd.xlane.f32.xlu0 %v341
      %v343 = vpop.xlane.xlu0 %342
      %v344 = vrot.slane %v343, 4
      %v345 = vadd.f32 %v343, %v344
      %v346 = vrot.slane %v345, 2
      %v347 = vadd.f32 %v345, %v346
      %v348 = vrot.slane %v347, 1
      %v349 = vadd.f32 %v347, %v348
      %s350 = vtos %v349
      %v351 = vld [vmem:[%s222] sm:$0xff]
      %v352 = vld [vmem:[%s222 + $0x8] sm:$0xff]
      %v353 = vadd.f32 %v351, %v352
      %354 = vadd.xlane.f32.xlu0 %v353
      %v355 = vpop.xlane.xlu0 %354
      %v356 = vrot.slane %v355, 4
      %v357 = vadd.f32 %v355, %v356
      %v358 = vrot.slane %v357, 2
      %v359 = vadd.f32 %v357, %v358
      %v360 = vrot.slane %v359, 1
      %v361 = vadd.f32 %v359, %v360
      %s362 = vtos %v361
      %v363 = vld [vmem:[%s231] sm:$0xff]
      %v364 = vld [vmem:[%s231 + $0x8] sm:$0xff]
      %v365 = vadd.f32 %v363, %v364
      %366 = vadd.xlane.f32.xlu0 %v365
      %v367 = vpop.xlane.xlu0 %366
      %v368 = vrot.slane %v367, 4
      %v369 = vadd.f32 %v367, %v368
      %v370 = vrot.slane %v369, 2
      %v371 = vadd.f32 %v369, %v370
      %v372 = vrot.slane %v371, 1
      %v373 = vadd.f32 %v371, %v372
      %s374 = vtos %v373
      %v375 = vld [vmem:[%s238] sm:$0xff]
      %v376 = vld [vmem:[%s238 + $0x8] sm:$0xff]
      %v377 = vadd.f32 %v375, %v376
      %378 = vadd.xlane.f32.xlu0 %v377
      %v379 = vpop.xlane.xlu0 %378
      %v380 = vrot.slane %v379, 4
      %v381 = vadd.f32 %v379, %v380
      %v382 = vrot.slane %v381, 2
      %v383 = vadd.f32 %v381, %v382
      %v384 = vrot.slane %v383, 1
      %v385 = vadd.f32 %v383, %v384
      %s386 = vtos %v385
      %v387 = vld [vmem:[%s245] sm:$0xff]
      %v388 = vld [vmem:[%s245 + $0x8] sm:$0xff]
      %v389 = vadd.f32 %v387, %v388
      %390 = vadd.xlane.f32.xlu0 %v389
      %v391 = vpop.xlane.xlu0 %390
      %v392 = vrot.slane %v391, 4
      %v393 = vadd.f32 %v391, %v392
      %v394 = vrot.slane %v393, 2
      %v395 = vadd.f32 %v393, %v394
      %v396 = vrot.slane %v395, 1
      %v397 = vadd.f32 %v395, %v396
      %s398 = vtos %v397
      %s399 = sadd.f32 %s302, 1e-05
      %v400 = vstv %s399
      %v401 = vrcp.pop %v400
      %v402 = vmul.f32 %v400, %v401
      %v403 = vsub.f32 1.0, %v402
      %v404 = vmul.f32 %v401, %v403
      %v405 = vadd.f32 %v401, %v404
      %vm406 = vweird.f32 %v400
      %vm407 = vweird.f32 %v401
      %vm408 = vmor %vm406, %vm407
      %v409 = vsel %vm408, %v401, %v405
      %v410 = vand.u32 2147483647, %v400
      %vm411 = vcmp.eq.f32.partialorder %v410, 8.507059e+37
      %v412 = vand.u32 %v400, 2147483648
      %v413 = vor.u32 1.1754944e-38, %v412
      %v414 = vsel %vm411, %v413, %v409
      %s415 = vtos %v414
      %s416 = smul.f32 %s266, %s415
      %s417 = sadd.f32 %s314, 1e-05
      %v418 = vstv %s417
      %v419 = vrcp.pop %v418
      %v420 = vmul.f32 %v418, %v419
      %v421 = vsub.f32 1.0, %v420
      %v422 = vmul.f32 %v419, %v421
      %v423 = vadd.f32 %v419, %v422
      %vm424 = vweird.f32 %v418
      %vm425 = vweird.f32 %v419
      %vm426 = vmor %vm424, %vm425
      %v427 = vsel %vm426, %v419, %v423
      %v428 = vand.u32 2147483647, %v418
      %vm429 = vcmp.eq.f32.partialorder %v428, 8.507059e+37
      %v430 = vand.u32 %v418, 2147483648
      %v431 = vor.u32 1.1754944e-38, %v430
      %v432 = vsel %vm429, %v431, %v427
      %s433 = vtos %v432
      %s434 = smul.f32 %s278, %s433
      %s435 = sadd.f32 %s416, %s434
      %s436 = sadd.f32 %s326, 1e-05
      %v437 = vstv %s436
      %v438 = vrcp.pop %v437
      %v439 = vmul.f32 %v437, %v438
      %v440 = vsub.f32 1.0, %v439
      %v441 = vmul.f32 %v438, %v440
      %v442 = vadd.f32 %v438, %v441
      %vm443 = vweird.f32 %v437
      %vm444 = vweird.f32 %v438
      %vm445 = vmor %vm443, %vm444
      %v446 = vsel %vm445, %v438, %v442
      %v447 = vand.u32 2147483647, %v437
      %vm448 = vcmp.eq.f32.partialorder %v447, 8.507059e+37
      %v449 = vand.u32 %v437, 2147483648
      %v450 = vor.u32 1.1754944e-38, %v449
      %v451 = vsel %vm448, %v450, %v446
      %s452 = vtos %v451
      %s453 = smul.f32 %s290, %s452
      %s454 = sadd.f32 %s435, %s453
      %s455 = sadd.f32 %s374, 1e-05
      %v456 = vstv %s455
      %v457 = vrcp.pop %v456
      %v458 = vmul.f32 %v456, %v457
      %v459 = vsub.f32 1.0, %v458
      %v460 = vmul.f32 %v457, %v459
      %v461 = vadd.f32 %v457, %v460
      %vm462 = vweird.f32 %v456
      %vm463 = vweird.f32 %v457
      %vm464 = vmor %vm462, %vm463
      %v465 = vsel %vm464, %v457, %v461
      %v466 = vand.u32 2147483647, %v456
      %vm467 = vcmp.eq.f32.partialorder %v466, 8.507059e+37
      %v468 = vand.u32 %v456, 2147483648
      %v469 = vor.u32 1.1754944e-38, %v468
      %v470 = vsel %vm467, %v469, %v465
      %s471 = vtos %v470
      %s472 = smul.f32 %s338, %s471
      %s473 = sadd.f32 %s386, 1e-05
      %v474 = vstv %s473
      %v475 = vrcp.pop %v474
      %v476 = vmul.f32 %v474, %v475
      %v477 = vsub.f32 1.0, %v476
      %v478 = vmul.f32 %v475, %v477
      %v479 = vadd.f32 %v475, %v478
      %vm480 = vweird.f32 %v474
      %vm481 = vweird.f32 %v475
      %vm482 = vmor %vm480, %vm481
      %v483 = vsel %vm482, %v475, %v479
      %v484 = vand.u32 2147483647, %v474
      %vm485 = vcmp.eq.f32.partialorder %v484, 8.507059e+37
      %v486 = vand.u32 %v474, 2147483648
      %v487 = vor.u32 1.1754944e-38, %v486
      %v488 = vsel %vm485, %v487, %v483
      %s489 = vtos %v488
      %s490 = smul.f32 %s350, %s489
      %s491 = sadd.f32 %s472, %s490
      %s492 = sadd.f32 %s398, 1e-05
      %v493 = vstv %s492
      %v494 = vrcp.pop %v493
      %v495 = vmul.f32 %v493, %v494
      %v496 = vsub.f32 1.0, %v495
      %v497 = vmul.f32 %v494, %v496
      %v498 = vadd.f32 %v494, %v497
      %vm499 = vweird.f32 %v493
      %vm500 = vweird.f32 %v494
      %vm501 = vmor %vm499, %vm500
      %v502 = vsel %vm501, %v494, %v498
      %v503 = vand.u32 2147483647, %v493
      %vm504 = vcmp.eq.f32.partialorder %v503, 8.507059e+37
      %v505 = vand.u32 %v493, 2147483648
      %v506 = vor.u32 1.1754944e-38, %v505
      %v507 = vsel %vm504, %v506, %v502
      %s508 = vtos %v507
      %s509 = smul.f32 %s362, %s508
      %s510 = sadd.f32 %s491, %s509
      %s511 = scalar_lea.smem [#allocation3], 0
      %512 = sst [smem:[%s511]] %s454
      %s513 = scalar_lea.smem [#allocation3], 1
      %514 = sst [smem:[%s513]] %s510
    $region17: #{_criterion_impl.1} parent=1 // pred_fallthru
      _
    // Predicated region
    $region18: #{_criterion_impl.1} parent=1 // pred_check
      _
    $region19: #{_criterion_impl.1} parent=1 // pred_check_branch
      %516 = sbr.rel (0) target = $region21
    $region20: #{_criterion_impl.1} parent=1 // pred_region
      %518 = vsyncadd [#allocation4], 0
      %s520 = sshll.u32 %s2, 4
      %s521 = int_to_ptr.vmem [resolvable:$true] %s520
      %523 = dma.smem_to_vmem [#allocation3], 16, %s521, [#allocation4]
    $region21: #{_criterion_impl.1} parent=1 // pred_fallthru
      _
    // Predicated region
    $region22: #{_criterion_impl.1} parent=1 // pred_check
      _
    $region23: #{_criterion_impl.1} parent=1 // pred_check_branch
      %525 = sbr.rel (0) target = $region25
    $region24: #{_criterion_impl.1} parent=1 // pred_region
      %527 = dma.done [#allocation4], 16
    $region25: #{_criterion_impl.1} parent=1 // pred_fallthru
      _
    %528 = sfence
    %529 = vsyncpa [#allocation4], 1

</llo_original>
